<compile_context>
chip_gen: v5e
topology: v5e:2x2
jax: 0.10.0
libtpu: 0.0.40
codegen_flags: <defaults>
</compile_context>

<pallas_src>
import functools

import jax
import jax.numpy as jnp
from jax.experimental import pallas as pl
from jax.experimental.pallas import tpu as pltpu


def am_softmax_kernel(x_ref, w_ref, winv_ref, label_ref,
                      logits_ref, rowloss_ref,
                      xinv_sc, m_sc, l_sc, tgt_sc,
                      *, margin_x_scale, c_valid, mask_cols):
    j = pl.program_id(1)
    last_j = pl.num_programs(1) - 1

    # Per-batch-tile init: x row inverse-norms (f32) and the online-logsumexp /
    # target accumulators.
    @pl.when(j == 0)
    def _init():
        xf = x_ref[...].astype(jnp.float32)                        # (tm, D)
        ssq = jnp.sum(xf * xf, axis=1, keepdims=True)              # (tm, 1)
        # 1 / clamp(||x||, 1e-12) == rsqrt(clamp(||x||^2, 1e-24))  (EUP)
        xinv_sc[...] = jax.lax.rsqrt(jnp.maximum(ssq, 1e-24))
        m_sc[...] = jnp.full_like(m_sc, -jnp.inf)
        l_sc[...] = jnp.zeros_like(l_sc)
        tgt_sc[...] = jnp.zeros_like(tgt_sc)

    # MXU matmul on the raw operands (bf16 stays bf16), f32 accumulation.
    raw = jnp.dot(x_ref[...], w_ref[...],
                  preferred_element_type=jnp.float32)              # (tm, tn)
    # winv already carries `scale`, so this is s * cos(theta).
    logits = raw * xinv_sc[...] * winv_ref[...]

    tm_, tn_ = logits.shape
    col = jax.lax.broadcasted_iota(jnp.int32, (tm_, tn_), 1)       # loop-invariant
    label_local = label_ref[...] - j * tn_                         # (tm, 1)
    is_target = (col == label_local)
    logits = logits - jnp.where(is_target, margin_x_scale, 0.0)

    if mask_cols:
        # C was padded up to a multiple of tn; mask padded columns out of the
        # logsumexp. Only the last class tile can contain invalid columns.
        valid = col < (c_valid - j * tn_)
        logits = jnp.where(valid, logits, -jnp.inf)

    logits_ref[...] = logits.astype(logits_ref.dtype)

    # Online logsumexp across class tiles.
    m_prev = m_sc[...]
    m_new = jnp.maximum(m_prev, jnp.max(logits, axis=1, keepdims=True))
    l_sc[...] = (l_sc[...] * jnp.exp(m_prev - m_new)
                 + jnp.sum(jnp.exp(logits - m_new), axis=1, keepdims=True))
    m_sc[...] = m_new

    # Target logit lives in exactly one class tile per row.
    tgt_sc[...] += jnp.sum(jnp.where(is_target, logits, 0.0),
                           axis=1, keepdims=True)

    @pl.when(j == last_j)
    def _finalize():
        rowloss_ref[...] = m_sc[...] + jnp.log(l_sc[...]) - tgt_sc[...]


def _rup(v, g):
    return -(-v // g) * g


def _rdown(v, g):
    return (v // g) * g


def am_softmax_forward(x, W, label, *, margin=0.2, scale=30.0,
                       block_b=None, block_c=None,
                       logits_dtype=None, compute_dtype=None, w_buffers=2):
    """Returns (loss, costh_m_s) matching AM_softmax.forward.

    NOTE: labels must lie in [0, nClasses); out-of-range labels silently drop
    the target term from the cross-entropy (same as the scatter_ in PyTorch
    would index-error).
    """
    B, D = x.shape
    D2, C = W.shape
    assert D == D2 and label.shape[0] == B
    f32 = jnp.float32
    logits_dtype = f32 if logits_dtype is None else logits_dtype

    # Hoisted out of the kernel (W is a reused layer parameter): column inverse
    # L2 norms with `scale` folded in.
    w32 = W.astype(f32)
    winv = scale / jnp.maximum(
        jnp.sqrt(jnp.sum(w32 * w32, axis=0, keepdims=True)), 1e-12)   # (1, C)

    # Optional bf16 streaming of the matmul operands (halves DMA + VMEM; the
    # kernel still accumulates in f32 and keeps xinv/winv in f32).
    if compute_dtype is not None:
        x_in, w_in = x.astype(compute_dtype), W.astype(compute_dtype)
    else:
        x_in, w_in = x, W

    x_bytes = jnp.dtype(x_in.dtype).itemsize
    w_bytes = jnp.dtype(w_in.dtype).itemsize
    o_bytes = jnp.dtype(logits_dtype).itemsize

    # VMEM budget: ~70% of detected per-core capacity (large on v5e/v6e's
    # 128 MiB, stays under v7x's 64 MiB). Fallback is v7x-safe.
    try:
        vmem_cap = int(pltpu.get_tpu_info().vmem_capacity_bytes)
    except Exception:
        vmem_cap = 64 * 1024 * 1024
    budget = max(32 * 1024 * 1024, int(vmem_cap * 0.70))

    # ---- class tile: multiple of 128, <= 512, keep padding waste small ----
    if block_c is not None:
        tn = int(block_c)
    else:
        tn = 128
        for cand in (512, 256, 128):
            if cand <= _rup(C, 128) and (_rup(C, cand) - C) <= max(C // 8, 127):
                tn = cand
                break
    C_pad = _rup(max(C, tn), tn)

    # ---- batch tile: multiple of 8, prefer large (fewer W re-streams from
    # HBM), but keep >= 2 batch tiles when B allows (2 TCs on v7x) and keep
    # padding waste small. ----
    if block_b is not None:
        tm = int(block_b)
    else:
        tm = 8
        for cand in (512, 256, 128, 64, 32, 16, 8):
            enough_tiles = (B <= 8) or (-(-B // cand) >= 2)
            small_waste = (_rup(B, cand) - B) <= max(B // 8, 7)
            if enough_tiles and small_waste:
                tm = cand
                break
        tm = min(tm, _rup(B, 8))
    B_pad = _rup(max(B, tm), tm)

    # Shrink tiles until the (double/triple)-buffered working set fits VMEM.
    def working_set(tm_, tn_):
        return (2 * tm_ * D * x_bytes            # x (double-buffered)
                + w_buffers * D * tn_ * w_bytes  # W
                + 2 * tn_ * 4                    # winv
                + 2 * tm_ * 4                    # labels
                + 2 * tm_ * tn_ * o_bytes        # logits out
                + 2 * tm_ * 4                    # row loss out
                + 4 * tm_ * 4)                   # scratch accumulators

    while working_set(tm, tn) > budget and tm > 8:
        tm = max(8, _rdown(tm // 2, 8))
        B_pad = _rup(max(B, tm), tm)
    while working_set(tm, tn) > budget and tn > 128:
        tn = max(128, _rdown(tn // 2, 128))
        C_pad = _rup(max(C, tn), tn)

    # ---- pad operands instead of falling back to full-axis blocks ----
    pad_b, pad_c = B_pad - B, C_pad - C
    label_i32 = label.astype(jnp.int32)
    if pad_b or pad_c:
        x_in = jnp.pad(x_in, ((0, pad_b), (0, 0)))
        w_in = jnp.pad(w_in, ((0, 0), (0, pad_c)))
        winv = jnp.pad(winv, ((0, 0), (0, pad_c)))
        label_i32 = jnp.pad(label_i32, ((0, pad_b),))
    label2d = label_i32.reshape(B_pad, 1)

    grid = (B_pad // tm, C_pad // tn)

    kernel = functools.partial(
        am_softmax_kernel,
        margin_x_scale=float(scale) * float(margin),
        c_valid=C,
        mask_cols=bool(pad_c > 0),
    )

    w_spec = (pl.BlockSpec((D, tn), lambda i, j: (0, j))
              if w_buffers == 2 else
              pl.BlockSpec((D, tn), lambda i, j: (0, j),
                           pipeline_mode=pl.Buffered(w_buffers)))

    logits_p, row_loss = pl.pallas_call(
        kernel,
        out_shape=(
            jax.ShapeDtypeStruct((B_pad, C_pad), logits_dtype),   # costh_m_s
            jax.ShapeDtypeStruct((B_pad, 1), f32),                # per-row CE
        ),
        grid_spec=pltpu.PrefetchScalarGridSpec(
            num_scalar_prefetch=0,
            grid=grid,
            in_specs=[
                pl.BlockSpec((tm, D), lambda i, j: (i, 0)),   # x
                w_spec,                                       # W
                pl.BlockSpec((1, tn), lambda i, j: (0, j)),   # s / ||W_c||
                pl.BlockSpec((tm, 1), lambda i, j: (i, 0)),   # labels
            ],
            out_specs=(
                pl.BlockSpec((tm, tn), lambda i, j: (i, j)),  # logits
                pl.BlockSpec((tm, 1), lambda i, j: (i, 0)),   # per-row loss
            ),
            scratch_shapes=[pltpu.VMEM((tm, 1), f32) for _ in range(4)],
        ),
        compiler_params=pltpu.CompilerParams(
            dimension_semantics=("parallel", "arbitrary"),
            vmem_limit_bytes=int(budget),
        ),
    )(x_in, w_in, winv, label2d)

    loss = jnp.mean(row_loss[:B, 0])          # mean reduction of CrossEntropyLoss
    logits = logits_p[:B, :C]
    return loss, logits


def _reference(x, W, label, margin, s):
    xn = x / jnp.maximum(jnp.linalg.norm(x, axis=1, keepdims=True), 1e-12)
    wn = W / jnp.maximum(jnp.linalg.norm(W, axis=0, keepdims=True), 1e-12)
    C = W.shape[1]
    ref_logits = s * (xn @ wn - margin * jax.nn.one_hot(label, C))
    ref_loss = jnp.mean(
        jax.nn.logsumexp(ref_logits, axis=1)
        - jnp.take_along_axis(ref_logits, label[:, None], axis=1)[:, 0]
    )
    return ref_loss, ref_logits


if __name__ == "__main__":
    margin, s = 0.2, 30.0
    key = jax.random.PRNGKey(0)

    # --- test 1: divisible shapes, explicit small tiles so the multi-class-
    # tile online-logsumexp path (2 batch tiles x 2 class tiles) is exercised.
    B, nOut, nClasses = 16, 32, 256
    k1, k2, k3, k4, k5, k6 = jax.random.split(key, 6)
    x = jax.random.normal(k1, (B, nOut), dtype=jnp.float32)
    xavier_std = (2.0 / (nOut + nClasses)) ** 0.5
    W = xavier_std * jax.random.normal(k2, (nOut, nClasses), dtype=jnp.float32)
    label = jax.random.randint(k3, (B,), 0, nClasses, dtype=jnp.int32)

    loss, costh_m_s = am_softmax_forward(x, W, label, margin=margin, scale=s,
                                         block_b=8, block_c=128)
    jax.block_until_ready((loss, costh_m_s))
    ref_loss, ref_logits = _reference(x, W, label, margin, s)
    assert jnp.allclose(costh_m_s, ref_logits, atol=3e-4, rtol=3e-4)
    assert jnp.allclose(loss, ref_loss, atol=3e-4, rtol=3e-4)

    # --- test 2: ragged shapes (auto tiles) to exercise the B/C padding and
    # the -inf masking of padded class columns.
    B2, nOut2, nClasses2 = 10, 32, 200
    x2 = jax.random.normal(k4, (B2, nOut2), dtype=jnp.float32)
    xavier_std2 = (2.0 / (nOut2 + nClasses2)) ** 0.5
    W2 = xavier_std2 * jax.random.normal(k5, (nOut2, nClasses2), dtype=jnp.float32)
    label2 = jax.random.randint(k6, (B2,), 0, nClasses2, dtype=jnp.int32)

    loss2, logits2 = am_softmax_forward(x2, W2, label2, margin=margin, scale=s)
    jax.block_until_ready((loss2, logits2))
    ref_loss2, ref_logits2 = _reference(x2, W2, label2, margin, s)
    assert jnp.allclose(logits2, ref_logits2, atol=3e-4, rtol=3e-4)
    assert jnp.allclose(loss2, ref_loss2, atol=3e-4, rtol=3e-4)

    print("KERNEL_OK")
</pallas_src>

<mosaic_0001>
module attributes {stable_mosaic.version = 11 : i64} {
  func.func @am_softmax_kernel(%arg0: i32, %arg1: i32, %arg2: memref<8x32xf32, #tpu.memory_space<vmem>>, %arg3: memref<32x128xf32, #tpu.memory_space<vmem>>, %arg4: memref<1x128xf32, #tpu.memory_space<vmem>>, %arg5: memref<8x1xi32, #tpu.memory_space<vmem>>, %arg6: memref<8x128xf32, #tpu.memory_space<vmem>>, %arg7: memref<8x1xf32, #tpu.memory_space<vmem>>, %arg8: memref<8x1xf32, #tpu.memory_space<vmem>>, %arg9: memref<8x1xf32, #tpu.memory_space<vmem>>, %arg10: memref<8x1xf32, #tpu.memory_space<vmem>>, %arg11: memref<8x1xf32, #tpu.memory_space<vmem>>) attributes {dimension_semantics = [#tpu.dimension_semantics<parallel>, #tpu.dimension_semantics<arbitrary>], iteration_bounds = array<i64: 2, 2>, scalar_prefetch = 0 : i64, scratch_operands = 4 : i64, tpu.core_type = #tpu.core_type<tc>, window_params = [{transform_indices = @transform_0, window_bounds = array<i64: 8, 32>}, {transform_indices = @transform_1, window_bounds = array<i64: 32, 128>}, {transform_indices = @transform_2, window_bounds = array<i64: 1, 128>}, {transform_indices = @transform_3, window_bounds = array<i64: 8, 1>}, {transform_indices = @transform_4, window_bounds = array<i64: 8, 128>}, {transform_indices = @transform_5, window_bounds = array<i64: 8, 1>}]} {
    %c0_i32 = arith.constant 0 : i32
    %0 = arith.cmpi eq, %arg1, %c0_i32 : i32
    %1 = arith.extui %0 : i1 to i32
    %c0_i32_0 = arith.constant 0 : i32
    %2 = arith.cmpi ne, %1, %c0_i32_0 : i32
    scf.if %2 {
      %c0_31 = arith.constant 0 : index
      %c0_32 = arith.constant 0 : index
      %50 = vector.load %arg2[%c0_31, %c0_32] : memref<8x32xf32, #tpu.memory_space<vmem>>, vector<8x32xf32>
      %51 = arith.mulf %50, %50 : vector<8x32xf32>
      %cst_33 = arith.constant dense<0.000000e+00> : vector<8xf32>
      %52 = vector.multi_reduction <add>, %51, %cst_33 [1] : vector<8x32xf32> to vector<8xf32>
      %53 = vector.shape_cast %52 : vector<8xf32> to vector<8x1xf32>
      %cst_34 = arith.constant 1.000000e-24 : f32
      %54 = vector.broadcast %cst_34 : f32 to vector<8x1xf32>
      %55 = arith.maximumf %53, %54 : vector<8x1xf32>
      %56 = math.rsqrt %55 : vector<8x1xf32>
      %c0_35 = arith.constant 0 : index
      %c0_36 = arith.constant 0 : index
      %57 = vector.load %arg8[%c0_35, %c0_36] : memref<8x1xf32, #tpu.memory_space<vmem>>, vector<8x1xf32>
      tpu.vector_store %arg8[%c0_35, %c0_36], %56 {strides = array<i32>} : memref<8x1xf32, #tpu.memory_space<vmem>>, vector<8x1xf32>,
      %cst_37 = arith.constant 0xFF800000 : f32
      %58 = vector.broadcast %cst_37 : f32 to vector<8x1xf32>
      %c0_38 = arith.constant 0 : index
      %c0_39 = arith.constant 0 : index
      %59 = vector.load %arg9[%c0_38, %c0_39] : memref<8x1xf32, #tpu.memory_space<vmem>>, vector<8x1xf32>
      tpu.vector_store %arg9[%c0_38, %c0_39], %58 {strides = array<i32>} : memref<8x1xf32, #tpu.memory_space<vmem>>, vector<8x1xf32>,
      %cst_40 = arith.constant 0.000000e+00 : f32
      %60 = vector.broadcast %cst_40 : f32 to vector<8x1xf32>
      %c0_41 = arith.constant 0 : index
      %c0_42 = arith.constant 0 : index
      %61 = vector.load %arg10[%c0_41, %c0_42] : memref<8x1xf32, #tpu.memory_space<vmem>>, vector<8x1xf32>
      tpu.vector_store %arg10[%c0_41, %c0_42], %60 {strides = array<i32>} : memref<8x1xf32, #tpu.memory_space<vmem>>, vector<8x1xf32>,
      %cst_43 = arith.constant 0.000000e+00 : f32
      %62 = vector.broadcast %cst_43 : f32 to vector<8x1xf32>
      %c0_44 = arith.constant 0 : index
      %c0_45 = arith.constant 0 : index
      %63 = vector.load %arg11[%c0_44, %c0_45] : memref<8x1xf32, #tpu.memory_space<vmem>>, vector<8x1xf32>
      tpu.vector_store %arg11[%c0_44, %c0_45], %62 {strides = array<i32>} : memref<8x1xf32, #tpu.memory_space<vmem>>, vector<8x1xf32>,
    } else {
    }
    %c0 = arith.constant 0 : index
    %c0_1 = arith.constant 0 : index
    %3 = vector.load %arg2[%c0, %c0_1] : memref<8x32xf32, #tpu.memory_space<vmem>>, vector<8x32xf32>
    %c0_2 = arith.constant 0 : index
    %c0_3 = arith.constant 0 : index
    %4 = vector.load %arg3[%c0_2, %c0_3] : memref<32x128xf32, #tpu.memory_space<vmem>>, vector<32x128xf32>
    %cst = arith.constant dense<0.000000e+00> : vector<8x128xf32>
    %5 = tpu.matmul %3, %4, %cst {dimension_numbers = #tpu.dot_dimension_numbers<[1], [0], [0], [1], [0, 0, 1, 1], [], []>} : vector<8x32xf32>, vector<32x128xf32>, vector<8x128xf32> -> vector<8x128xf32>
    %c0_4 = arith.constant 0 : index
    %c0_5 = arith.constant 0 : index
    %6 = vector.load %arg8[%c0_4, %c0_5] : memref<8x1xf32, #tpu.memory_space<vmem>>, vector<8x1xf32>
    %7 = vector.broadcast %6 : vector<8x1xf32> to vector<8x128xf32>
    %8 = arith.mulf %5, %7 : vector<8x128xf32>
    %c0_6 = arith.constant 0 : index
    %c0_7 = arith.constant 0 : index
    %9 = vector.load %arg4[%c0_6, %c0_7] : memref<1x128xf32, #tpu.memory_space<vmem>>, vector<1x128xf32>
    %10 = vector.broadcast %9 : vector<1x128xf32> to vector<8x128xf32>
    %11 = arith.mulf %8, %10 : vector<8x128xf32>
    %12 = tpu.iota {dimensions = array<i32: 1>} : vector<8x128xi32>
    %c0_8 = arith.constant 0 : index
    %c0_9 = arith.constant 0 : index
    %13 = vector.load %arg5[%c0_8, %c0_9] : memref<8x1xi32, #tpu.memory_space<vmem>>, vector<8x1xi32>
    %c128_i32 = arith.constant 128 : i32
    %14 = arith.muli %arg1, %c128_i32 : i32
    %15 = vector.broadcast %14 : i32 to vector<8x1xi32>
    %16 = arith.subi %13, %15 : vector<8x1xi32>
    %17 = vector.broadcast %16 : vector<8x1xi32> to vector<8x128xi32>
    %18 = arith.cmpi eq, %12, %17 : vector<8x128xi32>
    %cst_10 = arith.constant 6.000000e+00 : f32
    %cst_11 = arith.constant 0.000000e+00 : f32
    %19 = vector.broadcast %cst_10 : f32 to vector<8x128xf32>
    %20 = vector.broadcast %cst_11 : f32 to vector<8x128xf32>
    %21 = arith.select %18, %19, %20 : vector<8x128xi1>, vector<8x128xf32>
    %22 = arith.subf %11, %21 : vector<8x128xf32>
    %c0_12 = arith.constant 0 : index
    %c0_13 = arith.constant 0 : index
    %23 = vector.load %arg6[%c0_12, %c0_13] : memref<8x128xf32, #tpu.memory_space<vmem>>, vector<8x128xf32>
    tpu.vector_store %arg6[%c0_12, %c0_13], %22 {strides = array<i32>} : memref<8x128xf32, #tpu.memory_space<vmem>>, vector<8x128xf32>,
    %c0_14 = arith.constant 0 : index
    %c0_15 = arith.constant 0 : index
    %24 = vector.load %arg9[%c0_14, %c0_15] : memref<8x1xf32, #tpu.memory_space<vmem>>, vector<8x1xf32>
    %cst_16 = arith.constant dense<0xFF800000> : vector<8xf32>
    %25 = vector.multi_reduction <maximumf>, %22, %cst_16 [1] : vector<8x128xf32> to vector<8xf32>
    %26 = vector.shape_cast %25 : vector<8xf32> to vector<8x1xf32>
    %27 = arith.maximumf %24, %26 : vector<8x1xf32>
    %c0_17 = arith.constant 0 : index
    %c0_18 = arith.constant 0 : index
    %28 = vector.load %arg10[%c0_17, %c0_18] : memref<8x1xf32, #tpu.memory_space<vmem>>, vector<8x1xf32>
    %29 = arith.subf %24, %27 : vector<8x1xf32>
    %30 = math.exp %29 : vector<8x1xf32>
    %31 = arith.mulf %28, %30 : vector<8x1xf32>
    %32 = vector.broadcast %27 : vector<8x1xf32> to vector<8x128xf32>
    %33 = arith.subf %22, %32 : vector<8x128xf32>
    %34 = math.exp %33 : vector<8x128xf32>
    %cst_19 = arith.constant dense<0.000000e+00> : vector<8xf32>
    %35 = vector.multi_reduction <add>, %34, %cst_19 [1] : vector<8x128xf32> to vector<8xf32>
    %36 = vector.shape_cast %35 : vector<8xf32> to vector<8x1xf32>
    %37 = arith.addf %31, %36 : vector<8x1xf32>
    %c0_20 = arith.constant 0 : index
    %c0_21 = arith.constant 0 : index
    %38 = vector.load %arg10[%c0_20, %c0_21] : memref<8x1xf32, #tpu.memory_space<vmem>>, vector<8x1xf32>
    tpu.vector_store %arg10[%c0_20, %c0_21], %37 {strides = array<i32>} : memref<8x1xf32, #tpu.memory_space<vmem>>, vector<8x1xf32>,
    %c0_22 = arith.constant 0 : index
    %c0_23 = arith.constant 0 : index
    %39 = vector.load %arg9[%c0_22, %c0_23] : memref<8x1xf32, #tpu.memory_space<vmem>>, vector<8x1xf32>
    tpu.vector_store %arg9[%c0_22, %c0_23], %27 {strides = array<i32>} : memref<8x1xf32, #tpu.memory_space<vmem>>, vector<8x1xf32>,
    %c0_24 = arith.constant 0 : index
    %c0_25 = arith.constant 0 : index
    %40 = vector.load %arg11[%c0_24, %c0_25] : memref<8x1xf32, #tpu.memory_space<vmem>>, vector<8x1xf32>
    %cst_26 = arith.constant 0.000000e+00 : f32
    %41 = vector.broadcast %cst_26 : f32 to vector<8x128xf32>
    %42 = arith.select %18, %22, %41 : vector<8x128xi1>, vector<8x128xf32>
    %cst_27 = arith.constant dense<0.000000e+00> : vector<8xf32>
    %43 = vector.multi_reduction <add>, %42, %cst_27 [1] : vector<8x128xf32> to vector<8xf32>
    %44 = vector.shape_cast %43 : vector<8xf32> to vector<8x1xf32>
    %45 = arith.addf %40, %44 : vector<8x1xf32>
    %c0_28 = arith.constant 0 : index
    %c0_29 = arith.constant 0 : index
    %46 = vector.load %arg11[%c0_28, %c0_29] : memref<8x1xf32, #tpu.memory_space<vmem>>, vector<8x1xf32>
    tpu.vector_store %arg11[%c0_28, %c0_29], %45 {strides = array<i32>} : memref<8x1xf32, #tpu.memory_space<vmem>>, vector<8x1xf32>,
    %c1_i32 = arith.constant 1 : i32
    %47 = arith.cmpi eq, %arg1, %c1_i32 : i32
    %48 = arith.extui %47 : i1 to i32
    %c0_i32_30 = arith.constant 0 : i32
    %49 = arith.cmpi ne, %48, %c0_i32_30 : i32
    scf.if %49 {
      %c0_31 = arith.constant 0 : index
      %c0_32 = arith.constant 0 : index
      %50 = vector.load %arg9[%c0_31, %c0_32] : memref<8x1xf32, #tpu.memory_space<vmem>>, vector<8x1xf32>
      %c0_33 = arith.constant 0 : index
      %c0_34 = arith.constant 0 : index
      %51 = vector.load %arg10[%c0_33, %c0_34] : memref<8x1xf32, #tpu.memory_space<vmem>>, vector<8x1xf32>
      %52 = math.log %51 : vector<8x1xf32>
      %53 = arith.addf %50, %52 : vector<8x1xf32>
      %c0_35 = arith.constant 0 : index
      %c0_36 = arith.constant 0 : index
      %54 = vector.load %arg11[%c0_35, %c0_36] : memref<8x1xf32, #tpu.memory_space<vmem>>, vector<8x1xf32>
      %55 = arith.subf %53, %54 : vector<8x1xf32>
      %c0_37 = arith.constant 0 : index
      %c0_38 = arith.constant 0 : index
      %56 = vector.load %arg7[%c0_37, %c0_38] : memref<8x1xf32, #tpu.memory_space<vmem>>, vector<8x1xf32>
      tpu.vector_store %arg7[%c0_37, %c0_38], %55 {strides = array<i32>} : memref<8x1xf32, #tpu.memory_space<vmem>>, vector<8x1xf32>,
    } else {
    }
    return
  }
  func.func @transform_0(%arg0: i32, %arg1: i32) -> (i32, i32) {
    %c0_i32 = arith.constant 0 : i32
    %c0_i32_0 = arith.constant 0 : i32
    return %arg0, %c0_i32 : i32, i32
  }
  func.func @transform_1(%arg0: i32, %arg1: i32) -> (i32, i32) {
    %c0_i32 = arith.constant 0 : i32
    %c0_i32_0 = arith.constant 0 : i32
    return %c0_i32, %arg1 : i32, i32
  }
  func.func @transform_2(%arg0: i32, %arg1: i32) -> (i32, i32) {
    %c0_i32 = arith.constant 0 : i32
    %c0_i32_0 = arith.constant 0 : i32
    return %c0_i32, %arg1 : i32, i32
  }
  func.func @transform_3(%arg0: i32, %arg1: i32) -> (i32, i32) {
    %c0_i32 = arith.constant 0 : i32
    %c0_i32_0 = arith.constant 0 : i32
    return %arg0, %c0_i32 : i32, i32
  }
  func.func @transform_4(%arg0: i32, %arg1: i32) -> (i32, i32) {
    %c0_i32 = arith.constant 0 : i32
    return %arg0, %arg1 : i32, i32
  }
  func.func @transform_5(%arg0: i32, %arg1: i32) -> (i32, i32) {
    %c0_i32 = arith.constant 0 : i32
    %c0_i32_0 = arith.constant 0 : i32
    return %arg0, %c0_i32 : i32, i32
  }
}

</mosaic_0001>

<llo_original>
// kernel: tpu_custom_call.1
$region0: #{tpu_custom_call.1}
  #allocation0 [shape = 'u32[]', space=smem, size = 0x4, offset = 0x4, fixed_abs, tag = 'smem constant byte address 0x4 - core index']
  #allocation1 [shape = 'u32[72,128]{1,0:T(1,128)}', space=vmem, size = 0x9000, scoped, tag = 'internal scratch']
  #allocation2 [shape = 'f32[8,1]{1,0:T(8,128)}', space=vmem, size = 0x1000, scoped, tag = 'scratch operand']
  #allocation3 [shape = 'f32[8,1]{1,0:T(8,128)}', space=vmem, size = 0x1000, scoped, tag = 'scratch operand']
  #allocation4 [shape = 'f32[8,1]{1,0:T(8,128)}', space=vmem, size = 0x1000, scoped, tag = 'scratch operand']
  #allocation5 [shape = 'f32[8,1]{1,0:T(8,128)}', space=vmem, size = 0x1000, scoped, tag = 'scratch operand']
  %s0 = inlined_call_operand.vmem [shape: f32[16,32], index: 0, kind: input, shape index: {}]
  %s1 = inlined_call_operand.hbm [shape: f32[32,256], index: 1, kind: input, shape index: {}]
  %s2 = inlined_call_operand.hbm [shape: f32[1,256], index: 2, kind: input, shape index: {}]
  %s3 = inlined_call_operand.vmem [shape: s32[16,1], index: 3, kind: input, shape index: {}]
  %s4 = inlined_call_operand.hbm [shape: f32[16,256], index: 4, kind: output, shape index: {0}]
  %s5 = inlined_call_operand.vmem [shape: f32[16,1], index: 5, kind: output, shape index: {1}]
  %6 = xla_tuple %s4, %s5
  %s7 = sld [smem:[#allocation0]]
  $region73: #{tpu_custom_call.1} parent=0
    _
  %s9 = ssub.s32 1, %s7
  %s10 = scalar_select 0, %s9, %s7
  $region1: #{tpu_custom_call.1} parent=0
    #allocation6 [shape = 'u8[32768]{0}', space=vmem, size = 0x8000, scoped, tag = 'input window, operand 1']
    #allocation7 [shape = 's32[2]{0}', space=sflag, size = 0x8, scoped, tag = 'scoped memory for tpu_custom_call.1']
    #allocation8 [shape = 's32[2]{0}', space=sflag, size = 0x8, scoped, tag = 'scoped memory for tpu_custom_call.1']
    #allocation9 [shape = 'u8[1024]{0}', space=vmem, size = 0x400, scoped, tag = 'input window, operand 2']
    #allocation10 [shape = 's32[2]{0}', space=sflag, size = 0x8, scoped, tag = 'scoped memory for tpu_custom_call.1']
    #allocation11 [shape = 'u8[8192]{0}', space=vmem, size = 0x2000, scoped, tag = 'output window, operand 0']
    %11 = vsyncpa [#allocation7], 0
    %s12 = scalar_lea.sflag [#allocation7], 1
    %13 = vsyncpa %s12, 0
    %14 = vsyncpa [#allocation10], 0
    %s15 = scalar_lea.sflag [#allocation10], 1
    %16 = vsyncpa %s15, 0
    %17 = vsyncpa [#allocation8], 0
    %s18 = scalar_lea.sflag [#allocation8], 1
    %19 = vsyncpa %s18, 0
    loop: start=0, step=1, limit=6
    $region2: #{tpu_custom_call.1} parent=1 // loop_pre_header
      _
    $region3: #{tpu_custom_call.1} parent=1 // loop_header
      %s21 = sphi 0, %s25
      %p22 = scmp.ge.s32.totalorder %s21, 6
      %s28 = sphi 0, %s40
      %s29 = sphi 0, %s36
      %s30 = sphi 0, %s28
      %s31 = sphi 0, %s29
      %s32 = sphi 0, %s30
      %s33 = sphi 0, %s31
      %s43 = sphi 0, %s45
      %s46 = sphi 0, %s43
      %s47 = sphi 0, %s46
      %s63 = sphi 0, %s47
      %s69 = sphi 0, %s71
      %s72 = sphi 0, %s69
      %s73 = sphi 0, %s72
      %s89 = sphi 0, %s73
      %s95 = sphi 0, %s97
      %s98 = sphi 0, %s95
      %s99 = sphi 0, %s98
      %s115 = sphi 0, %s99
      %s121 = sphi 0, %s123
      %s124 = sphi 0, %s121
      %s125 = sphi 0, %s124
      %s141 = sphi 0, %s125
      %s149 = sphi 0, %s151
      %s152 = sphi 0, %s149
      %s153 = sphi 0, %s152
      %s169 = sphi 0, %s153
      %s175 = sphi 0, %s177
      %s178 = sphi 0, %s175
      %s179 = sphi 0, %s178
      %s195 = sphi 0, %s179
    $region4: #{tpu_custom_call.1} parent=1 // loop_header_branch
      %24 = sbr.rel (%p22) target = $region8
    $region5: #{tpu_custom_call.1} parent=1 // loop_body
      %s26 = ssub.s32 %s21, 1
      %s27 = ssub.s32 %s21, 2
      %s34 = sadd.s32 1, %s29
      %p35 = scmp.ge.s32.totalorder %s34, 2
      %s36 = scalar_select %p35, 0, %s34
      %s37 = sadd.s32 1, %s28
      %s38 = scalar_select %p35, %s37, %s28
      %p39 = scmp.ge.s32.totalorder %s38, 2
      %s40 = scalar_select %p39, 0, %s38
      %s41 = ssub.s32 %s28, %s40
      %p42 = scmp.eq.s32.totalorder %s41, 0
      %s44 = sadd.s32 %s43, 1
      %s45 = scalar_select %p42, %s43, %s44
      %p48 = pneg %p42
      %p49 = scmp.eq.s32.totalorder %s21, 3
      %p50 = por %p48, %p49
      %p51 = scmp.ne.s32.totalorder %s43, %s46
      %p52 = scmp.eq.s32.totalorder %s21, 0
      %p53 = por %p51, %p52
      %p54 = scmp.ne.s32.totalorder %s43, %s46
      %p55 = scmp.eq.s32.totalorder %s26, 3
      %p56 = por %p54, %p55
      %p57 = scmp.ne.s32.totalorder %s46, %s47
      %p58 = scmp.eq.s32.totalorder %s26, 0
      %p59 = por %p57, %p58
      %p60 = scmp.ne.s32.totalorder %s46, %s47
      %p61 = scmp.eq.s32.totalorder %s27, 3
      %p62 = por %p60, %p61
      %p64 = scmp.ne.s32.totalorder %s47, %s63
      %p65 = scmp.eq.s32.totalorder %s27, 0
      %p66 = por %p64, %p65
      %s67 = ssub.s32 %s29, %s36
      %p68 = scmp.eq.s32.totalorder %s67, 0
      %s70 = sadd.s32 %s69, 1
      %s71 = scalar_select %p68, %s69, %s70
      %p74 = pneg %p68
      %p75 = scmp.eq.s32.totalorder %s21, 3
      %p76 = por %p74, %p75
      %p77 = scmp.ne.s32.totalorder %s69, %s72
      %p78 = scmp.eq.s32.totalorder %s21, 0
      %p79 = por %p77, %p78
      %p80 = scmp.ne.s32.totalorder %s69, %s72
      %p81 = scmp.eq.s32.totalorder %s26, 3
      %p82 = por %p80, %p81
      %p83 = scmp.ne.s32.totalorder %s72, %s73
      %p84 = scmp.eq.s32.totalorder %s26, 0
      %p85 = por %p83, %p84
      %p86 = scmp.ne.s32.totalorder %s72, %s73
      %p87 = scmp.eq.s32.totalorder %s27, 3
      %p88 = por %p86, %p87
      %p90 = scmp.ne.s32.totalorder %s73, %s89
      %p91 = scmp.eq.s32.totalorder %s27, 0
      %p92 = por %p90, %p91
      %s93 = ssub.s32 %s29, %s36
      %p94 = scmp.eq.s32.totalorder %s93, 0
      %s96 = sadd.s32 %s95, 1
      %s97 = scalar_select %p94, %s95, %s96
      %p100 = pneg %p94
      %p101 = scmp.eq.s32.totalorder %s21, 3
      %p102 = por %p100, %p101
      %p103 = scmp.ne.s32.totalorder %s95, %s98
      %p104 = scmp.eq.s32.totalorder %s21, 0
      %p105 = por %p103, %p104
      %p106 = scmp.ne.s32.totalorder %s95, %s98
      %p107 = scmp.eq.s32.totalorder %s26, 3
      %p108 = por %p106, %p107
      %p109 = scmp.ne.s32.totalorder %s98, %s99
      %p110 = scmp.eq.s32.totalorder %s26, 0
      %p111 = por %p109, %p110
      %p112 = scmp.ne.s32.totalorder %s98, %s99
      %p113 = scmp.eq.s32.totalorder %s27, 3
      %p114 = por %p112, %p113
      %p116 = scmp.ne.s32.totalorder %s99, %s115
      %p117 = scmp.eq.s32.totalorder %s27, 0
      %p118 = por %p116, %p117
      %s119 = ssub.s32 %s28, %s40
      %p120 = scmp.eq.s32.totalorder %s119, 0
      %s122 = sadd.s32 %s121, 1
      %s123 = scalar_select %p120, %s121, %s122
      %p126 = pneg %p120
      %p127 = scmp.eq.s32.totalorder %s21, 3
      %p128 = por %p126, %p127
      %p129 = scmp.ne.s32.totalorder %s121, %s124
      %p130 = scmp.eq.s32.totalorder %s21, 0
      %p131 = por %p129, %p130
      %p132 = scmp.ne.s32.totalorder %s121, %s124
      %p133 = scmp.eq.s32.totalorder %s26, 3
      %p134 = por %p132, %p133
      %p135 = scmp.ne.s32.totalorder %s124, %s125
      %p136 = scmp.eq.s32.totalorder %s26, 0
      %p137 = por %p135, %p136
      %p138 = scmp.ne.s32.totalorder %s124, %s125
      %p139 = scmp.eq.s32.totalorder %s27, 3
      %p140 = por %p138, %p139
      %p142 = scmp.ne.s32.totalorder %s125, %s141
      %p143 = scmp.eq.s32.totalorder %s27, 0
      %p144 = por %p142, %p143
      %s145 = ssub.s32 %s28, %s40
      %s146 = ssub.s32 %s29, %s36
      %s147 = sor.u32 %s145, %s146
      %p148 = scmp.eq.s32.totalorder %s147, 0
      %s150 = sadd.s32 %s149, 1
      %s151 = scalar_select %p148, %s149, %s150
      %p154 = pneg %p148
      %p155 = scmp.eq.s32.totalorder %s21, 3
      %p156 = por %p154, %p155
      %p157 = scmp.ne.s32.totalorder %s149, %s152
      %p158 = scmp.eq.s32.totalorder %s21, 0
      %p159 = por %p157, %p158
      %p160 = scmp.ne.s32.totalorder %s149, %s152
      %p161 = scmp.eq.s32.totalorder %s26, 3
      %p162 = por %p160, %p161
      %p163 = scmp.ne.s32.totalorder %s152, %s153
      %p164 = scmp.eq.s32.totalorder %s26, 0
      %p165 = por %p163, %p164
      %p166 = scmp.ne.s32.totalorder %s152, %s153
      %p167 = scmp.eq.s32.totalorder %s27, 3
      %p168 = por %p166, %p167
      %p170 = scmp.ne.s32.totalorder %s153, %s169
      %p171 = scmp.eq.s32.totalorder %s27, 0
      %p172 = por %p170, %p171
      %s173 = ssub.s32 %s28, %s40
      %p174 = scmp.eq.s32.totalorder %s173, 0
      %s176 = sadd.s32 %s175, 1
      %s177 = scalar_select %p174, %s175, %s176
      %p180 = pneg %p174
      %p181 = scmp.eq.s32.totalorder %s21, 3
      %p182 = por %p180, %p181
      %p183 = scmp.ne.s32.totalorder %s175, %s178
      %p184 = scmp.eq.s32.totalorder %s21, 0
      %p185 = por %p183, %p184
      %p186 = scmp.ne.s32.totalorder %s175, %s178
      %p187 = scmp.eq.s32.totalorder %s26, 3
      %p188 = por %p186, %p187
      %p189 = scmp.ne.s32.totalorder %s178, %s179
      %p190 = scmp.eq.s32.totalorder %s26, 0
      %p191 = por %p189, %p190
      %p192 = scmp.ne.s32.totalorder %s178, %s179
      %p193 = scmp.eq.s32.totalorder %s27, 3
      %p194 = por %p192, %p193
      %p196 = scmp.ne.s32.totalorder %s179, %s195
      %p197 = scmp.eq.s32.totalorder %s27, 0
      %p198 = por %p196, %p197
      %p199 = scmp.le.s32.totalorder 1, %s21
      %p200 = scmp.lt.s32.totalorder %s21, 5
      %p201 = pnand %p199, %p200
      %p202 = pneg %p201
      // Predicated region
      $region9: #{tpu_custom_call.1} parent=5 // pred_check
        _
      $region10: #{tpu_custom_call.1} parent=5 // pred_check_branch
        %204 = sbr.rel (%p201) target = $region12
      $region11: #{tpu_custom_call.1} parent=5 // pred_region
        %s205 = ssub.s32 %s21, 1
      $region12: #{tpu_custom_call.1} parent=5 // pred_fallthru
        _
      %p206 = scmp.lt.s32.totalorder %s21, 4
      // Predicated region
      $region13: #{tpu_custom_call.1} parent=5 // pred_check
        %p207 = pneg %p206
      $region14: #{tpu_custom_call.1} parent=5 // pred_check_branch
        %209 = sbr.rel (%p207) target = $region16
      $region15: #{tpu_custom_call.1} parent=5 // pred_region
        // Predicated region
        $region17: #{tpu_custom_call.1} parent=15 // pred_check
          %p210 = pneg %p53
        $region18: #{tpu_custom_call.1} parent=15 // pred_check_branch
          %212 = sbr.rel (%p210) target = $region20
        $region19: #{tpu_custom_call.1} parent=15 // pred_region
          %p213 = scmp.lt.s32.totalorder %s28, 1
          %s214 = scalar_select %p213, %s28, 1
          %s215 = smul.addr %s214, 8
          %s216 = scalar_lea.vmem %s0, %s215
        $region20: #{tpu_custom_call.1} parent=15 // pred_fallthru
          _
        // Predicated region
        $region21: #{tpu_custom_call.1} parent=15 // pred_check
          %p217 = pneg %p79
        $region22: #{tpu_custom_call.1} parent=15 // pred_check_branch
          %219 = sbr.rel (%p217) target = $region24
        $region23: #{tpu_custom_call.1} parent=15 // pred_region
          %s220 = sand.u32 %s69, 1
          %s221 = scalar_lea.sflag [#allocation7], %s220
          %s222 = sand.u32 %s69, 1
          %s223 = smul.addr %s222, 32
          %s224 = scalar_lea.vmem [#allocation6], %s223
          %226 = vsyncadd %s221, 0
          %s227 = smul.addr %s29, 8
          %s228 = scalar_lea.hbm %s1, %s227
          %s229 = sshll.u32 %s228, 4
          %s230 = int_to_ptr.hbm [resolvable:$true] %s229
          %s231 = sshll.u32 %s224, 4
          %s232 = int_to_ptr.vmem [resolvable:$true] %s231
          %237 = dma.hbm_to_vmem [thread:$0]  %s230, 512, %s232, %s221, 256, 128, 8
        $region24: #{tpu_custom_call.1} parent=15 // pred_fallthru
          _
        // Predicated region
        $region25: #{tpu_custom_call.1} parent=15 // pred_check
          %p238 = pneg %p105
        $region26: #{tpu_custom_call.1} parent=15 // pred_check_branch
          %240 = sbr.rel (%p238) target = $region28
        $region27: #{tpu_custom_call.1} parent=15 // pred_region
          %s241 = sand.u32 %s95, 1
          %s242 = scalar_lea.sflag [#allocation10], %s241
          %s243 = sand.u32 %s95, 1
          %s244 = scalar_lea.vmem [#allocation9], %s243
          %246 = vsyncadd %s242, 0
          %s247 = scalar_lea.hbm %s2, %s29
          %s249 = sshll.u32 %s247, 4
          %s250 = int_to_ptr.hbm [resolvable:$true] %s249
          %s251 = sshll.u32 %s244, 4
          %s252 = int_to_ptr.vmem [resolvable:$true] %s251
          %254 = dma.hbm_to_vmem [thread:$0]  %s250, 16, %s252, %s242
        $region28: #{tpu_custom_call.1} parent=15 // pred_fallthru
          _
        // Predicated region
        $region29: #{tpu_custom_call.1} parent=15 // pred_check
          %p255 = pneg %p131
        $region30: #{tpu_custom_call.1} parent=15 // pred_check_branch
          %257 = sbr.rel (%p255) target = $region32
        $region31: #{tpu_custom_call.1} parent=15 // pred_region
          %p258 = scmp.lt.s32.totalorder %s28, 1
          %s259 = scalar_select %p258, %s28, 1
          %s260 = smul.addr %s259, 8
          %s261 = scalar_lea.vmem %s3, %s260
        $region32: #{tpu_custom_call.1} parent=15 // pred_fallthru
          _
      $region16: #{tpu_custom_call.1} parent=5 // pred_fallthru
        _
      %p262 = scmp.le.s32.totalorder 1, %s21
      %p263 = scmp.lt.s32.totalorder %s21, 5
      %p264 = pnand %p262, %p263
      %p265 = pneg %p264
      // Predicated region
      $region33: #{tpu_custom_call.1} parent=5 // pred_check
        _
      $region34: #{tpu_custom_call.1} parent=5 // pred_check_branch
        %267 = sbr.rel (%p264) target = $region36
      $region35: #{tpu_custom_call.1} parent=5 // pred_region
        %s268 = ssub.s32 %s21, 1
        %s269 = sand.u32 %s72, 1
        %s270 = scalar_lea.sflag [#allocation7], %s269
        %s271 = sand.u32 %s72, 1
        %s272 = smul.addr %s271, 32
        %s273 = scalar_lea.vmem [#allocation6], %s272
        // Predicated region
        $region37: #{tpu_custom_call.1} parent=35 // pred_check
          %p274 = pneg %p85
        $region38: #{tpu_custom_call.1} parent=35 // pred_check_branch
          %276 = sbr.rel (%p274) target = $region40
        $region39: #{tpu_custom_call.1} parent=35 // pred_region
          %278 = dma.done %s270, 512
        $region40: #{tpu_custom_call.1} parent=35 // pred_fallthru
          _
        %s279 = sand.u32 %s98, 1
        %s280 = scalar_lea.sflag [#allocation10], %s279
        %s281 = sand.u32 %s98, 1
        %s282 = scalar_lea.vmem [#allocation9], %s281
        // Predicated region
        $region41: #{tpu_custom_call.1} parent=35 // pred_check
          %p283 = pneg %p111
        $region42: #{tpu_custom_call.1} parent=35 // pred_check_branch
          %285 = sbr.rel (%p283) target = $region44
        $region43: #{tpu_custom_call.1} parent=35 // pred_region
          %287 = dma.done %s280, 16
        $region44: #{tpu_custom_call.1} parent=35 // pred_fallthru
          _
        %p288 = scmp.lt.s32.totalorder %s30, 1
        %s289 = scalar_select %p288, %s30, 1
        %s290 = smul.addr %s289, 8
        %s291 = scalar_lea.vmem %s0, %s290
        %p292 = pneg %p59
        %p293 = pneg %p56
        %s294 = sand.u32 %s72, 1
        %s295 = scalar_lea.sflag [#allocation7], %s294
        %s296 = sand.u32 %s72, 1
        %s297 = smul.addr %s296, 32
        %s298 = scalar_lea.vmem [#allocation6], %s297
        %p299 = pneg %p85
        %p300 = pneg %p82
        %s301 = sand.u32 %s98, 1
        %s302 = scalar_lea.sflag [#allocation10], %s301
        %s303 = sand.u32 %s98, 1
        %s304 = scalar_lea.vmem [#allocation9], %s303
        %p305 = pneg %p111
        %p306 = pneg %p108
        %p307 = scmp.lt.s32.totalorder %s30, 1
        %s308 = scalar_select %p307, %s30, 1
        %s309 = smul.addr %s308, 8
        %s310 = scalar_lea.vmem %s3, %s309
        %p311 = pneg %p137
        %p312 = pneg %p134
        %p313 = pneg %p165
        %p314 = pneg %p162
        %s315 = sand.u32 %s152, 1
        %s316 = scalar_lea.sflag [#allocation8], %s315
        %s317 = sand.u32 %s152, 1
        %s318 = smul.addr %s317, 8
        %s319 = scalar_lea.vmem [#allocation11], %s318
        %p320 = pneg %p191
        %p321 = pneg %p188
        %p322 = scmp.lt.s32.totalorder %s30, 1
        %s323 = scalar_select %p322, %s30, 1
        %s324 = smul.addr %s323, 8
        %s325 = scalar_lea.vmem %s5, %s324
        %p326 = scmp.lt.s32.totalorder %s30, 1
        %s327 = scalar_select %p326, %s30, 1
        %s328 = smul.addr %s327, 8
        %s329 = scalar_lea.vmem %s0, %s328
        %p330 = scmp.lt.s32.totalorder %s30, 1
        %s331 = scalar_select %p330, %s30, 1
        %s332 = smul.addr %s331, 8
        %s333 = scalar_lea.vmem %s3, %s332
        %p334 = scmp.lt.s32.totalorder %s30, 1
        %s335 = scalar_select %p334, %s30, 1
        %s336 = smul.addr %s335, 8
        %s337 = scalar_lea.vmem %s5, %s336
        %p338 = scmp.eq.s32.totalorder %s31, 0
        // Predicated region
        $region45: #{tpu_custom_call.1} parent=35 // pred_check
          %p339 = pneg %p338
        $region46: #{tpu_custom_call.1} parent=35 // pred_check_branch
          %341 = sbr.rel (%p339) target = $region48
        $region47: #{tpu_custom_call.1} parent=35 // pred_region
          %v342 = vld [vmem:[%s329] sm:$0xff]
          %v343 = vmul.f32 %v342, %v342
          %vm344 = vcmask 261120
          %v345 = vsel %vm344, %v343, 0.0
          %346 = vadd.xlane.f32.xlu0 %v345
          %v347 = vpop.xlane.xlu0 %346
          %v348 = vmax.f32 %v347, 1e-24
          %v349 = vrsqrt.pop %v348
          %v350 = vmul.f32 %v349, %v348
          %v351 = vmul.f32 %v350, %v349
          %v352 = vmul.f32 0.5, %v351
          %v353 = vsub.f32 1.5, %v352
          %v354 = vmul.f32 %v349, %v353
          %vm355 = vweird.f32 %v348
          %vm356 = vweird.f32 %v349
          %vm357 = vmor %vm355, %vm356
          %v358 = vsel %vm357, %v349, %v354
          %vm359 = vcmask 7168
          %360 = vst.msk [vmem:[#allocation2] sm:$0xff] %vm359, %v358
          %361 = vst.msk [vmem:[#allocation3] sm:$0xff] %vm359, -inf
          %362 = vst.msk [vmem:[#allocation4] sm:$0xff] %vm359, 0.0
          %363 = vst.msk [vmem:[#allocation5] sm:$0xff] %vm359, 0.0
        $region48: #{tpu_custom_call.1} parent=35 // pred_fallthru
          _
        %v364 = vld [vmem:[%s329] sm:$0xff]
        %v365 = vld [vmem:[%s273] sm:$0xff]
        %v366 = vld [vmem:[%s273 + $0x8] sm:$0xff]
        %v367 = vld [vmem:[%s273 + $0x10] sm:$0xff]
        %v368 = vld [vmem:[%s273 + $0x18] sm:$0xff]
        %vm369 = vcmask 261120
        %v371 = vsel %vm369, %v364, 0
        %373 = vmatpush.msra.mxu0 0.0
        %374 = vmatpush.msra.mxu0 0.0
        %375 = vmatpush.msra.mxu0 0.0
        %376 = vmatpush.msra.mxu0 0.0
        %377 = vmatpush.msra.mxu0 0.0
        %378 = vmatpush.msra.mxu0 0.0
        %379 = vmatpush.msra.mxu0 0.0
        %380 = vmatpush.msra.mxu0 0.0
        %381 = vmatpush.msra.mxu0 0.0
        %382 = vmatpush.msra.mxu0 0.0
        %383 = vmatpush.msra.mxu0 0.0
        %384 = vmatpush.msra.mxu0 0.0
        %385 = vmatpush.msra.mxu0 %v368
        %386 = vmatpush.msra.mxu0 %v367
        %387 = vmatpush.msra.mxu0 %v366
        %388 = vmatpush.msra.mxu0 %v365
        %389 = vmatmul.f32.gmra.mxu0 %v371
        %v390 = vpop.f32.mrf.mxu0
        %v391 = vadd.f32 0.0, %v390
        %392 = vdwg.mxu0
        %v393 = vld [vmem:[#allocation2] sm:$0xff]
        %395 = vset.pattern.permute.xlu0 0
        %396 = vperm.xlu0 %395, %v393
        %v397 = vpop.permute.xlu0 %396
        %v399 = vmul.f32 %v391, %v397
        %v400 = vld [vmem:[%s282] sm:$0x1]
        %v402 = vperm.slane %v400, 0
        %v404 = vmul.f32 %v399, %v402
        %v405 = vlaneseq
        %v406 = vand.u32 %v405, 127
        %v407 = vld [vmem:[%s333] sm:$0xff]
        %s408 = smul.u32 %s31, 128
        %v409 = vstv %s408
        %v410 = vsub.s32 %v407, %v409
        %411 = vset.pattern.permute.xlu0 0
        %412 = vperm.xlu0 %411, %v410
        %v413 = vpop.permute.xlu0 %412
        %vm414 = vcmp.eq.s32.totalorder %v406, %v413
        %v415 = vsel %vm414, 6.0, 0.0
        %v416 = vsub.f32 %v404, %v415
        %417 = vst [vmem:[%s319] sm:$0xff] %v416
        %v418 = vld [vmem:[#allocation3] sm:$0xff]
        %419 = vmax.xlane.f32.xlu0 %v416
        %v420 = vpop.xlane.xlu0 %419
        %v421 = vmax.f32 %v418, %v420
        %v422 = vld [vmem:[#allocation4] sm:$0xff]
        %v423 = vsub.f32 %v418, %v421
        %v424 = vmul.f32 %v423, 1.442695
        %v425 = vpow.pop %v424
        %v426 = vmul.f32 %v422, %v425
        %428 = vset.pattern.permute.xlu0 0
        %429 = vperm.xlu0 %428, %v421
        %v430 = vpop.permute.xlu0 %429
        %v432 = vsub.f32 %v416, %v430
        %v433 = vmul.f32 %v432, 1.442695
        %v434 = vpow.pop %v433
        %435 = vadd.xlane.f32.xlu0 %v434
        %v436 = vpop.xlane.xlu0 %435
        %v437 = vadd.f32 %v426, %v436
        %vm438 = vcmask 7168
        %439 = vst.msk [vmem:[#allocation4] sm:$0xff] %vm438, %v437
        %440 = vst.msk [vmem:[#allocation3] sm:$0xff] %vm438, %v421
        %v441 = vld [vmem:[#allocation5] sm:$0xff]
        %v442 = vsel %vm414, %v416, 0.0
        %443 = vadd.xlane.f32.xlu0 %v442
        %v444 = vpop.xlane.xlu0 %443
        %v445 = vadd.f32 %v441, %v444
        %446 = vst.msk [vmem:[#allocation5] sm:$0xff] %vm438, %v445
        %p447 = scmp.eq.s32.totalorder %s31, 1
        // Predicated region
        $region49: #{tpu_custom_call.1} parent=35 // pred_check
          %p448 = pneg %p447
        $region50: #{tpu_custom_call.1} parent=35 // pred_check_branch
          %450 = sbr.rel (%p448) target = $region52
        $region51: #{tpu_custom_call.1} parent=35 // pred_region
          %v451 = vld [vmem:[#allocation3] sm:$0xff]
          %v452 = vld [vmem:[#allocation4] sm:$0xff]
          %v453 = vlog2.pop %v452
          %v454 = vmul.f32 %v453, 0.6931472
          %v455 = vadd.f32 %v451, %v454
          %v456 = vld [vmem:[#allocation5] sm:$0xff]
          %v457 = vsub.f32 %v455, %v456
          %458 = vst.msk [vmem:[%s337] sm:$0xff] %vm438, %v457
        $region52: #{tpu_custom_call.1} parent=35 // pred_fallthru
          _
        %s459 = sand.u32 %s152, 1
        %s460 = scalar_lea.sflag [#allocation8], %s459
        %s461 = sand.u32 %s152, 1
        %s462 = smul.addr %s461, 8
        %s463 = scalar_lea.vmem [#allocation11], %s462
        %p464 = scmp.lt.s32.totalorder %s30, 1
        %s465 = scalar_select %p464, %s30, 1
        %s466 = smul.addr %s465, 8
        %s467 = scalar_lea.vmem %s5, %s466
        // Predicated region
        $region53: #{tpu_custom_call.1} parent=35 // pred_check
          %p468 = pneg %p162
        $region54: #{tpu_custom_call.1} parent=35 // pred_check_branch
          %470 = sbr.rel (%p468) target = $region56
        $region55: #{tpu_custom_call.1} parent=35 // pred_region
          %472 = vsyncadd %s460, 0
          %s473 = smul.addr %s30, 2
          %s474 = sadd.s32 %s31, %s473
          %s475 = smul.addr %s474, 8
          %s476 = scalar_lea.hbm %s4, %s475
          %s478 = sshll.u32 %s463, 4
          %s479 = int_to_ptr.vmem [resolvable:$true] %s478
          %s480 = sshll.u32 %s476, 4
          %s481 = int_to_ptr.hbm [resolvable:$true] %s480
          %483 = dma.vmem_to_hbm [thread:$0]  %s479, 128, %s481, %s460
        $region56: #{tpu_custom_call.1} parent=35 // pred_fallthru
          _
        // Predicated region
        $region57: #{tpu_custom_call.1} parent=35 // pred_check
          %p484 = pneg %p188
        $region58: #{tpu_custom_call.1} parent=35 // pred_check_branch
          %486 = sbr.rel (%p484) target = $region60
        $region59: #{tpu_custom_call.1} parent=35 // pred_region
          _
        $region60: #{tpu_custom_call.1} parent=35 // pred_fallthru
          _
      $region36: #{tpu_custom_call.1} parent=5 // pred_fallthru
        _
      %p487 = scmp.le.s32.totalorder 2, %s21
      // Predicated region
      $region61: #{tpu_custom_call.1} parent=5 // pred_check
        %p488 = pneg %p487
      $region62: #{tpu_custom_call.1} parent=5 // pred_check_branch
        %490 = sbr.rel (%p488) target = $region64
      $region63: #{tpu_custom_call.1} parent=5 // pred_region
        %s491 = ssub.s32 %s21, 2
        // Predicated region
        $region65: #{tpu_custom_call.1} parent=63 // pred_check
          %p492 = pneg %p168
        $region66: #{tpu_custom_call.1} parent=63 // pred_check_branch
          %494 = sbr.rel (%p492) target = $region68
        $region67: #{tpu_custom_call.1} parent=63 // pred_region
          %s495 = sand.u32 %s153, 1
          %s496 = scalar_lea.sflag [#allocation8], %s495
          %s497 = sand.u32 %s153, 1
          %s498 = smul.addr %s497, 8
          %s499 = scalar_lea.vmem [#allocation11], %s498
          %501 = dma.done %s496, 128
        $region68: #{tpu_custom_call.1} parent=63 // pred_fallthru
          _
        // Predicated region
        $region69: #{tpu_custom_call.1} parent=63 // pred_check
          %p502 = pneg %p194
        $region70: #{tpu_custom_call.1} parent=63 // pred_check_branch
          %504 = sbr.rel (%p502) target = $region72
        $region71: #{tpu_custom_call.1} parent=63 // pred_region
          %p505 = scmp.lt.s32.totalorder %s32, 1
          %s506 = scalar_select %p505, %s32, 1
          %s507 = smul.addr %s506, 8
          %s508 = scalar_lea.vmem %s5, %s507
        $region72: #{tpu_custom_call.1} parent=63 // pred_fallthru
          _
      $region64: #{tpu_custom_call.1} parent=5 // pred_fallthru
        _
    $region6: #{tpu_custom_call.1} parent=1 // loop_footer
      %s25 = sadd.s32 1, %s21
    $region7: #{tpu_custom_call.1} parent=1 // loop_footer_branch
      %20 = sbr.rel target = $region3
    $region8: #{tpu_custom_call.1} parent=1 // loop_exit
      _
    %509 = vsyncpa [#allocation7], 1
    %s510 = scalar_lea.sflag [#allocation7], 1
    %511 = vsyncpa %s510, 1
    %512 = vsyncpa [#allocation10], 1
    %s513 = scalar_lea.sflag [#allocation10], 1
    %514 = vsyncpa %s513, 1
    %515 = vsyncpa [#allocation8], 1
    %s516 = scalar_lea.sflag [#allocation8], 1
    %517 = vsyncpa %s516, 1

</llo_original>
